<compile_context>
chip_gen: v7x
topology: tpu7x:2x2x1
jax: 0.10.0
libtpu: 0.0.40
codegen_flags: <defaults>
</compile_context>

<pallas_src>
import jax
import jax.numpy as jnp
from jax.experimental import pallas as pl
from jax.experimental.pallas import tpu as pltpu


def _glo_gather_kernel(idx_ref, table_hbm, out_ref, copy_sem):
    # idx_ref:   (m_pad,) int32  — scalar-prefetched indices, live in SMEM
    # table_hbm: (N, D)  float32 — embedding table, left in HBM (pl.ANY)
    # out_ref:   (block_m, D)    — VMEM output block for this grid step
    # copy_sem:  ()              — DMA semaphore shared by all row copies
    block_m = out_ref.shape[0]
    base = pl.program_id(0) * block_m

    # Issue all row-gather DMAs for this block (many in flight at once).
    @pl.loop(0, block_m)
    def _issue(r):
        row = idx_ref[base + r]
        pltpu.make_async_copy(
            table_hbm.at[pl.ds(row, 1), :],
            out_ref.at[pl.ds(r, 1), :],
            copy_sem,
        ).start()

    # Drain: every copy has the same size, so waiting block_m times on the
    # shared semaphore accounts for all outstanding copies.
    @pl.loop(0, block_m)
    def _drain(r):
        row = idx_ref[base + r]
        pltpu.make_async_copy(
            table_hbm.at[pl.ds(row, 1), :],
            out_ref.at[pl.ds(r, 1), :],
            copy_sem,
        ).wait()


def glo_encoder_forward(x, embed_weight, *, block_m=256, force_pallas=False):
    """Embedding lookup: out[..., :] = embed_weight[x[...], :].

    x: integer array of arbitrary shape. embed_weight: (N, D) float32.
    """
    n, d = embed_weight.shape
    orig_shape = x.shape
    # torch.nn.Embedding raises on out-of-range ids; we clamp so the HBM
    # gather DMA can never read out of bounds.
    idx_flat = jnp.clip(x.reshape(-1).astype(jnp.int32), 0, n - 1)
    m = idx_flat.shape[0]

    # Small-problem fast path: below ~256 KiB of output, pallas_call launch /
    # pipeline overhead dwarfs the work — XLA's native gather is faster.
    if not force_pallas and m * d * 4 < 256 * 1024:
        return jnp.take(embed_weight, idx_flat, axis=0).reshape(orig_shape + (d,))

    # Pad the row count to a multiple of block_m (padded rows gather row 0
    # and are sliced off afterwards).
    m_pad = pl.cdiv(m, block_m) * block_m
    idx_padded = jnp.zeros((m_pad,), jnp.int32).at[:m].set(idx_flat)

    out = pl.pallas_call(
        _glo_gather_kernel,
        out_shape=jax.ShapeDtypeStruct((m_pad, d), embed_weight.dtype),
        grid_spec=pltpu.PrefetchScalarGridSpec(
            num_scalar_prefetch=1,                        # idx_padded -> SMEM
            grid=(m_pad // block_m,),
            in_specs=[
                pl.BlockSpec(memory_space=pl.ANY),        # table stays in HBM
            ],
            out_specs=pl.BlockSpec((block_m, d), lambda i, idx: (i, 0)),
            scratch_shapes=[pltpu.SemaphoreType.DMA(())],
        ),
        compiler_params=pltpu.CompilerParams(
            dimension_semantics=("parallel",),            # v7x: shard over 2 TCs
        ),
    )(idx_padded, embed_weight)

    return out[:m].reshape(orig_shape + (d,))


def init_glo_encoder_params(key, num_embeddings, embedding_dim):
    # Matches nn.init.uniform(weight, a=0.05) -> U[0.05, 1.0)
    return jax.random.uniform(
        key, (num_embeddings, embedding_dim), jnp.float32,
        minval=0.05, maxval=1.0,
    )


if __name__ == "__main__":
    key = jax.random.PRNGKey(0)
    k_w, k_x = jax.random.split(key)

    num_embeddings = 16
    embedding_dim = 32

    weight = init_glo_encoder_params(k_w, num_embeddings, embedding_dim)

    # Example input: batch=2, seq=8 integer ids (typical GLO latent-id usage).
    x = jax.random.randint(k_x, (2, 8), 0, num_embeddings, dtype=jnp.int32)

    # force_pallas=True so this small example exercises the kernel (the
    # default path would take the jnp.take fast path at this size).
    out = glo_encoder_forward(x, weight, force_pallas=True)
    out = jax.block_until_ready(out)

    ref = weight[x]
    assert out.shape == (2, 8, embedding_dim), out.shape
    assert jnp.array_equal(out, ref), "mismatch vs reference embedding lookup"

    # Second check crosses a block boundary: m=700 -> m_pad=768, grid=(3,).
    x2 = jax.random.randint(
        jax.random.PRNGKey(1), (7, 100), 0, num_embeddings, dtype=jnp.int32
    )
    out2 = jax.block_until_ready(glo_encoder_forward(x2, weight, force_pallas=True))
    assert jnp.array_equal(out2, weight[x2]), "mismatch on multi-block case"

    print("KERNEL_OK")
</pallas_src>

<mosaic_0001>
module attributes {stable_mosaic.version = 11 : i64} {
  func.func @_glo_gather_kernel(%arg0: i32, %arg1: memref<256xi32, #tpu.memory_space<smem>>, %arg2: memref<16x32xf32, #tpu.memory_space<any>>, %arg3: memref<256x32xf32, #tpu.memory_space<vmem>>, %arg4: memref<!tpu.dma_semaphore, #tpu.memory_space<semaphore_mem>>) attributes {dimension_semantics = [#tpu.dimension_semantics<parallel>], iteration_bounds = array<i64: 1>, scalar_prefetch = 1 : i64, scratch_operands = 1 : i64, tpu.core_type = #tpu.core_type<tc>, window_params = [{}, {transform_indices = @transform_1, window_bounds = array<i64: 256, 32>}]} {
    %c256_i32 = arith.constant 256 : i32
    %0 = arith.muli %arg0, %c256_i32 : i32
    %c0_i32 = arith.constant 0 : i32
    %c256_i32_0 = arith.constant 256 : i32
    %1 = arith.addi %c0_i32, %c256_i32_0 : i32
    %c1_i32 = arith.constant 1 : i32
    scf.for %arg5 = %c0_i32 to %1 step %c1_i32  : i32 {
      %c1_i32_6 = arith.constant 1 : i32
      %3 = arith.muli %arg5, %c1_i32_6 : i32
      %c0_i32_7 = arith.constant 0 : i32
      %4 = arith.addi %c0_i32_7, %3 : i32
      %5 = arith.addi %0, %4 : i32
      %6 = arith.index_cast %5 : i32 to index
      %7 = memref.load %arg1[%6] : memref<256xi32, #tpu.memory_space<smem>>
      %c0_i32_8 = arith.constant 0 : i32
      %8 = tpu.memref_slice %arg2[%7, %c0_i32_8] : memref<16x32xf32, #tpu.memory_space<any>> -> memref<1x32xf32, #tpu.memory_space<any>>
      %c0_i32_9 = arith.constant 0 : i32
      %9 = tpu.memref_slice %arg3[%4, %c0_i32_9] : memref<256x32xf32, #tpu.memory_space<vmem>> -> memref<1x32xf32, #tpu.memory_space<vmem>>
      tpu.enqueue_dma source(%8 : memref<1x32xf32, #tpu.memory_space<any>>) target(%9 : memref<1x32xf32, #tpu.memory_space<vmem>>) target_semaphore(%arg4 : memref<!tpu.dma_semaphore, #tpu.memory_space<semaphore_mem>>)
    }
    %c256_i32_1 = arith.constant 256 : i32
    %c0_i32_2 = arith.constant 0 : i32
    %c256_i32_3 = arith.constant 256 : i32
    %2 = arith.addi %c0_i32_2, %c256_i32_3 : i32
    %c1_i32_4 = arith.constant 1 : i32
    scf.for %arg5 = %c0_i32_2 to %2 step %c1_i32_4  : i32 {
      %c1_i32_6 = arith.constant 1 : i32
      %3 = arith.muli %arg5, %c1_i32_6 : i32
      %c0_i32_7 = arith.constant 0 : i32
      %4 = arith.addi %c0_i32_7, %3 : i32
      %5 = arith.addi %0, %4 : i32
      %6 = arith.index_cast %5 : i32 to index
      %7 = memref.load %arg1[%6] : memref<256xi32, #tpu.memory_space<smem>>
      %c0_i32_8 = arith.constant 0 : i32
      %8 = tpu.memref_slice %arg2[%7, %c0_i32_8] : memref<16x32xf32, #tpu.memory_space<any>> -> memref<1x32xf32, #tpu.memory_space<any>>
      %c0_i32_9 = arith.constant 0 : i32
      %9 = tpu.memref_slice %arg3[%4, %c0_i32_9] : memref<256x32xf32, #tpu.memory_space<vmem>> -> memref<1x32xf32, #tpu.memory_space<vmem>>
      tpu.wait_dma2 semaphore(%arg4 : memref<!tpu.dma_semaphore, #tpu.memory_space<semaphore_mem>>) src(%8 : memref<1x32xf32, #tpu.memory_space<any>>) dst(%9 : memref<1x32xf32, #tpu.memory_space<vmem>>)
    }
    %c256_i32_5 = arith.constant 256 : i32
    return
  }
  func.func @transform_1(%arg0: i32, %arg1: memref<256xi32, #tpu.memory_space<smem>>) -> (i32, i32) {
    %c0_i32 = arith.constant 0 : i32
    %c0_i32_0 = arith.constant 0 : i32
    return %arg0, %c0_i32 : i32, i32
  }
}

</mosaic_0001>

<llo_original>
// kernel: tpu_custom_call.1
$region0: #{tpu_custom_call.1}
  #allocation0 [shape = 'u32[]', space=smem, size = 0x4, offset = 0x4, fixed_abs, tag = 'smem constant byte address 0x4 - core index']
  #allocation1 [shape = 'u32[144,128]{1,0:T(1,128)}', space=vmem, size = 0x12000, scoped, tag = 'internal scratch']
  #allocation2 [shape = 's32[1]{0}', space=sflag, size = 0x4, scoped, tag = 'scratch operand']
  #allocation3 [shape = 's32[1]{0}', space=sflag, size = 0x4, scoped, tag = 'scoped memory for tpu_custom_call.1']
  #allocation4 [shape = 'u8[1024]{0}', space=smem, size = 0x400, scoped, tag = 'prefetched SMEM operand 0']
  #allocation5 [shape = 's32[]', space=sflag, size = 0x4, offset = 0, fixed_abs, tag = 'sflag constant byte address 0x0 - dummy sync flag']
  #allocation6 [shape = 's32[]', space=sflag, size = 0x4, offset = 0, fixed_abs, tag = 'sflag constant byte address 0x0 - dummy sync flag']
  #allocation7 [shape = 'u32[]', space=smem, size = 0x4, offset = 0x44, fixed_abs, tag = 'smem constant byte address 0x44 - assertion arg 0']
  #allocation8 [shape = 'u32[]', space=smem, size = 0x4, offset = 0x48, fixed_abs, tag = 'smem constant byte address 0x48 - assertion arg 1']
  %s0 = inlined_call_operand.hbm [shape: s32[256], index: 0, kind: input, shape index: {}]
  %s1 = inlined_call_operand.hbm [shape: f32[16,32], index: 1, kind: input, shape index: {}]
  %s2 = inlined_call_operand.vmem [shape: f32[256,32], index: 2, kind: output, shape index: {}]
  %s3 = sld [smem:[#allocation0]]
  $region28: #{tpu_custom_call.1} parent=0
    _
  %s5 = ssub.s32 1, %s3
  %s6 = scalar_select 0, %s5, %s3
  %8 = dma.hbm_to_smem %s0, 32, [#allocation4], [#allocation3]
  %9 = dma.done [#allocation3], 32
  %10 = sfence
  %s11 = smul.u32 0, 256
  loop: start=0, step=1, limit=256
  $region2: #{tpu_custom_call.1} parent=0 // loop_pre_header
    _
  $region3: #{tpu_custom_call.1} parent=0 // loop_header
    %s13 = sphi 0, %s17
    %p14 = scmp.ge.s32.totalorder %s13, 256
  $region4: #{tpu_custom_call.1} parent=0 // loop_header_branch
    %16 = sbr.rel (%p14) target = $region8
  $region5: #{tpu_custom_call.1} parent=0 // loop_body
    %s18 = sadd.s32 %s11, %s13
    %s19 = sld [smem:[#allocation4 + %s18]]
    %s20 = smul.addr %s19, 16
    %s21 = scalar_lea.hbm %s1, %s20
    %s22 = scalar_lea.vmem %s2, %s13
    // Predicated region
    $region9: #{tpu_custom_call.1} parent=5 // pred_check
      _
    $region10: #{tpu_custom_call.1} parent=5 // pred_check_branch
      %24 = sbr.rel target = $region12
    $region11: #{tpu_custom_call.1} parent=5 // pred_region
      %25 = sst [smem:[#allocation7]] [#allocation6]
      %26 = sst [smem:[#allocation8]] [#allocation5]
    $region12: #{tpu_custom_call.1} parent=5 // pred_fallthru
      _
    %28 = shalt.err (0)
    %s30 = sshll.u32 %s22, 4
    %s31 = int_to_ptr.vmem [resolvable:$true] %s30
    %33 = dma.hbm_to_vmem [thread:$0]  %s21, 16, %s31, [#allocation2]
  $region6: #{tpu_custom_call.1} parent=0 // loop_footer
    %s17 = sadd.s32 1, %s13
  $region7: #{tpu_custom_call.1} parent=0 // loop_footer_branch
    %12 = sbr.rel target = $region3
  $region8: #{tpu_custom_call.1} parent=0 // loop_exit
    _
  loop: start=0, step=1, limit=256
  $region13: #{tpu_custom_call.1} parent=0 // loop_pre_header
    _
  $region14: #{tpu_custom_call.1} parent=0 // loop_header
    %s35 = sphi 0, %s39
    %p36 = scmp.ge.s32.totalorder %s35, 256
  $region15: #{tpu_custom_call.1} parent=0 // loop_header_branch
    %38 = sbr.rel (%p36) target = $region19
  $region16: #{tpu_custom_call.1} parent=0 // loop_body
    %s40 = sadd.s32 %s11, %s35
    %s41 = sld [smem:[#allocation4 + %s40]]
    %s42 = smul.u32 1, 1
    %s43 = sshll.u32 %s42, 4
    %44 = dma.done [#allocation2], %s43
  $region17: #{tpu_custom_call.1} parent=0 // loop_footer
    %s39 = sadd.s32 1, %s35
  $region18: #{tpu_custom_call.1} parent=0 // loop_footer_branch
    %34 = sbr.rel target = $region14
  $region19: #{tpu_custom_call.1} parent=0 // loop_exit
    _
  // Predicated region
  $region20: #{tpu_custom_call.1} parent=0 // pred_check
    _
  $region21: #{tpu_custom_call.1} parent=0 // pred_check_branch
    %46 = sbr.rel (0) target = $region23
  $region22: #{tpu_custom_call.1} parent=0 // pred_region
    _
  $region23: #{tpu_custom_call.1} parent=0 // pred_fallthru
    _
  // Predicated region
  $region24: #{tpu_custom_call.1} parent=0 // pred_check
    _
  $region25: #{tpu_custom_call.1} parent=0 // pred_check_branch
    %48 = sbr.rel (0) target = $region27
  $region26: #{tpu_custom_call.1} parent=0 // pred_region
    _
  $region27: #{tpu_custom_call.1} parent=0 // pred_fallthru
    _
  %49 = vsyncmov [#allocation2]
  %s50 = vpop.sfrf %49
  %p51 = scmp.eq.s32.totalorder %s50, 0
  %p52 = pneg %p51
  %54 = shalt.err (%p52)

</llo_original>
